<compile_context>
chip_gen: v6e
topology: v6e:2x2x1
jax: 0.10.0
libtpu: 0.0.40
codegen_flags: <defaults>
</compile_context>

<pallas_src>
import jax
import jax.numpy as jnp
from jax.experimental import pallas as pl
from jax.experimental.pallas import tpu as pltpu

B = 2          # batch
D_IMG = 400    # flattened LeNet5 image feature (16*5*5)
D_SND = 80     # sound feature dim
K_ENC = 16     # encoder 'fc0' output dim (weighting dim of sound_mean)
D_CAT = D_IMG + D_SND   # 480  (fc1 input)
H1 = 64        # fc1 output
NCLS = 10      # fc2 output

LANE = 128
X_PAD = 512    # fc1 input padded 480 -> 512 (4 lane groups)

# --- parameter-slab row layout (all section starts are multiples of 8) ---
ROW_W1 = 0                      # [0, 512)   : fc1 weight^T, (480,64) in top-left, rest 0
ROW_B1 = 512                    # [512, 520) : row 512 = fc1 bias (padded to 128 lanes)
ROW_W2 = 520                    # [520, 648) : fc2 weight^T, (64,10) in top-left, rest 0
ROW_B2 = 648                    # [648, 656) : row 648 = fc2 bias (padded to 128 lanes)
ROW_SMA = 656                   # [656, 672) : sound_mean^T at cols 1..80, col 0 = 1.0 (denominator)
ROW_SMB = 672                   # [672, 688) : sound_mean^T at cols 16..95 (cat-aligned placement)
P_ROWS = 688

# --- packed-output lane layout (all offsets multiples of 128; every lane written) ---
OFF_X = 0                       # [0, 512)    : x = softplus(enc1) + [img | snd]   (f = [:480])
OFF_SND = 512                   # [512, 640)  : normalized sound feature at lanes 1..80
OFF_F1 = 640                    # [640, 768)  : f1 (valid lanes 0..63)
OFF_LOG = 768                   # [768, 896)  : logits (valid lanes 0..9)
PACK_W = 896


def _softplus(x):
    # matches torch.nn.Softplus(beta=1, threshold=20); exp/log1p land on the EUP slot.
    return jnp.where(x > 20.0, x, jnp.log1p(jnp.exp(x)))


def soundlenet5_kernel(imgp_ref, e0_ref, e1p_ref, e2p_ref, p_ref, packed_ref):
    # --- 'fc0' branch: softplus weighting + weighted sound average (MXU dot;
    #     denominator folded into column 0 of the smT slab section) ---
    w = _softplus(e0_ref[...])                                            # (B, 16)
    num_a = jnp.dot(w, p_ref[ROW_SMA:ROW_SMA + K_ENC, :],
                    preferred_element_type=jnp.float32)                   # (B, 128); lane 0 = sum(w)
    inv_den = pl.reciprocal(num_a[:, 0:1], approx=False)                  # (B, 1)  EUP, exact
    snd_a = num_a * inv_den                                               # lanes 1..80 = sound feature
    packed_ref[:, OFF_SND:OFF_SND + LANE] = snd_a                         # dense 128-lane store

    # same weighted average, placed at cat lanes 400..479 (within-group lanes 16..95)
    num_b = jnp.dot(w, p_ref[ROW_SMB:ROW_SMB + K_ENC, :],
                    preferred_element_type=jnp.float32)                   # (B, 128)
    snd_b = num_b * inv_den                                               # lanes 16..95 = sound feature

    # --- 'fc1' noise add + concat, staged contiguously through the packed output ---
    x_full = _softplus(e1p_ref[...]) + imgp_ref[...]                      # (B, 512)
    packed_ref[:, OFF_X:OFF_X + 384] = x_full[:, :384]                    # dense 384-lane store
    packed_ref[:, OFF_X + 384:OFF_X + X_PAD] = x_full[:, 384:X_PAD] + snd_b
    x = packed_ref[:, OFF_X:OFF_X + X_PAD]                                # (B, 512) read-back

    # --- fc1 as ONE dot (output padded to 128 lanes; pad rows of W1 are zero) + ReLU ---
    h = (jnp.dot(x, p_ref[ROW_W1:ROW_W1 + X_PAD, :],
                 preferred_element_type=jnp.float32)
         + p_ref[ROW_B1:ROW_B1 + 1, :])                                   # (B, 128)
    h = jnp.maximum(h, 0.0)                                               # lanes 64.. stay 0

    # --- 'fc2' noise add ---
    f1 = _softplus(e2p_ref[...]) + h                                      # (B, 128)
    packed_ref[:, OFF_F1:OFF_F1 + LANE] = f1                              # dense 128-lane store

    # --- dropout (eval: identity) + fc2 (output padded to 128 lanes via zero W2/b2 pads) ---
    logits = (jnp.dot(f1, p_ref[ROW_W2:ROW_W2 + LANE, :],
                      preferred_element_type=jnp.float32)
              + p_ref[ROW_B2:ROW_B2 + 1, :])                              # (B, 128)
    packed_ref[:, OFF_LOG:OFF_LOG + LANE] = logits                        # dense 128-lane store


def prepare_params(sound_mean, fc1_w, fc1_b, fc2_w, fc2_b):
    """One-time parameter packing (hoisted off the per-call path).

    sound_mean: (1, D_SND, K_ENC) batch-invariant buffer (the module .expand()s it).
    fc1_w: (64, 480), fc1_b: (64,), fc2_w: (10, 64), fc2_b: (10,).
    Returns a single (P_ROWS, 128) f32 slab -> one parameter DMA per call.
    """
    smT = jnp.transpose(sound_mean.reshape(D_SND, K_ENC)).astype(jnp.float32)   # (16, 80)
    slab = jnp.zeros((P_ROWS, LANE), jnp.float32)
    slab = slab.at[ROW_W1:ROW_W1 + D_CAT, :H1].set(fc1_w.T.astype(jnp.float32))
    slab = slab.at[ROW_B1, :H1].set(fc1_b.astype(jnp.float32))
    slab = slab.at[ROW_W2:ROW_W2 + H1, :NCLS].set(fc2_w.T.astype(jnp.float32))
    slab = slab.at[ROW_B2, :NCLS].set(fc2_b.astype(jnp.float32))
    slab = slab.at[ROW_SMA:ROW_SMA + K_ENC, 1:1 + D_SND].set(smT)
    slab = slab.at[ROW_SMA:ROW_SMA + K_ENC, 0].set(1.0)          # denominator column
    slab = slab.at[ROW_SMB:ROW_SMB + K_ENC, 16:16 + D_SND].set(smT)
    return slab


@jax.jit
def soundlenet5_forward(img_feature, enc_fc0, enc_fc1, enc_fc2, param_slab):
    """img_feature:(B,400) f32, enc_fc0:(B,16), enc_fc1:(B,480), enc_fc2:(B,64),
    param_slab = prepare_params(...).  Returns (logits, f, f1, sound_feature)."""
    b = img_feature.shape[0]

    # Zero-pad activations to lane multiples (keeps every in-kernel op 128-aligned; the
    # padded lanes only ever hit zero weight rows / never-read output lanes).
    imgp = jnp.pad(img_feature, ((0, 0), (0, X_PAD - D_IMG)))
    e1p = jnp.pad(enc_fc1, ((0, 0), (0, X_PAD - D_CAT)))
    e2p = jnp.pad(enc_fc2, ((0, 0), (0, LANE - H1)))

    vmem = pl.BlockSpec(memory_space=pltpu.MemorySpace.VMEM)
    packed = pl.pallas_call(
        soundlenet5_kernel,
        out_shape=jax.ShapeDtypeStruct((b, PACK_W), jnp.float32),
        in_specs=[vmem] * 5,
        out_specs=vmem,
    )(imgp, enc_fc0, e1p, e2p, param_slab)

    logits = packed[:, OFF_LOG:OFF_LOG + NCLS]
    f = packed[:, OFF_X:OFF_X + D_CAT]                 # contiguous [img | snd] segment
    f1 = packed[:, OFF_F1:OFF_F1 + H1]
    snd = packed[:, OFF_SND + 1:OFF_SND + 1 + D_SND]   # col 0 is the denominator lane
    return logits, f, f1, snd


def _reference(img_feature, sound_mean, enc_fc0, enc_fc1, enc_fc2,
               fc1_w, fc1_b, fc2_w, fc2_b):
    w = jax.nn.softplus(enc_fc0)                                           # (B, K)
    sm = jnp.broadcast_to(sound_mean, (img_feature.shape[0],) + sound_mean.shape[1:])
    snd = jnp.sum(sm * w[:, None, :], -1) / jnp.sum(w, -1, keepdims=True)  # (B, S)
    x = jnp.concatenate([img_feature, snd], axis=1)
    x = jax.nn.softplus(enc_fc1) + x
    f = x
    h = jnp.maximum(x @ fc1_w.T + fc1_b, 0.0)
    h = jax.nn.softplus(enc_fc2) + h
    f1 = h
    logits = h @ fc2_w.T + fc2_b
    return logits, f, f1, snd


if __name__ == "__main__":
    key = jax.random.PRNGKey(0)
    ks = jax.random.split(key, 9)

    img_feature = jax.random.normal(ks[0], (B, D_IMG), jnp.float32)
    sound_mean = jax.random.normal(ks[1], (1, D_SND, K_ENC), jnp.float32)   # batch-invariant buffer
    enc_fc0 = jax.random.normal(ks[2], (B, K_ENC), jnp.float32)
    enc_fc1 = jax.random.normal(ks[3], (B, D_CAT), jnp.float32)
    enc_fc2 = jax.random.normal(ks[4], (B, H1), jnp.float32)

    # deterministic parameter init (nn.Linear-like scale)
    fc1_w = jax.random.uniform(ks[5], (H1, D_CAT), jnp.float32, -1.0, 1.0) / jnp.sqrt(D_CAT)
    fc1_b = jax.random.uniform(ks[6], (H1,), jnp.float32, -1.0, 1.0) / jnp.sqrt(D_CAT)
    fc2_w = jax.random.uniform(ks[7], (NCLS, H1), jnp.float32, -1.0, 1.0) / jnp.sqrt(H1)
    fc2_b = jax.random.uniform(ks[8], (NCLS,), jnp.float32, -1.0, 1.0) / jnp.sqrt(H1)

    param_slab = prepare_params(sound_mean, fc1_w, fc1_b, fc2_w, fc2_b)   # one-time prep (hoisted)

    outs = soundlenet5_forward(img_feature, enc_fc0, enc_fc1, enc_fc2, param_slab)
    outs = jax.block_until_ready(outs)

    refs = _reference(img_feature, sound_mean, enc_fc0, enc_fc1, enc_fc2,
                      fc1_w, fc1_b, fc2_w, fc2_b)
    for o, r in zip(outs, refs):
        assert o.shape == r.shape and o.dtype == r.dtype
        err = float(jnp.max(jnp.abs(o - r)))
        assert err < 1e-4, err

    print("KERNEL_OK")
</pallas_src>

<mosaic_0001>
module attributes {stable_mosaic.version = 11 : i64} {
  func.func @soundlenet5_kernel(%arg0: memref<2x512xf32, #tpu.memory_space<vmem>>, %arg1: memref<2x16xf32, #tpu.memory_space<vmem>>, %arg2: memref<2x512xf32, #tpu.memory_space<vmem>>, %arg3: memref<2x128xf32, #tpu.memory_space<vmem>>, %arg4: memref<688x128xf32, #tpu.memory_space<vmem>>, %arg5: memref<2x896xf32, #tpu.memory_space<vmem>>) attributes {dimension_semantics = [], scalar_prefetch = 0 : i64, scratch_operands = 0 : i64, tpu.core_type = #tpu.core_type<tc>} {
    %c0 = arith.constant 0 : index
    %c0_0 = arith.constant 0 : index
    %0 = vector.load %arg1[%c0, %c0_0] : memref<2x16xf32, #tpu.memory_space<vmem>>, vector<2x16xf32>
    %cst = arith.constant 2.000000e+01 : f32
    %1 = vector.broadcast %cst : f32 to vector<2x16xf32>
    %2 = arith.cmpf ogt, %0, %1 : vector<2x16xf32>
    %3 = math.exp %0 : vector<2x16xf32>
    %4 = math.log1p %3 : vector<2x16xf32>
    %5 = arith.select %2, %0, %4 : vector<2x16xi1>, vector<2x16xf32>
    %c656 = arith.constant 656 : index
    %c0_1 = arith.constant 0 : index
    %6 = vector.load %arg4[%c656, %c0_1] : memref<688x128xf32, #tpu.memory_space<vmem>>, vector<16x128xf32>
    %cst_2 = arith.constant dense<0.000000e+00> : vector<2x128xf32>
    %7 = tpu.matmul %5, %6, %cst_2 {dimension_numbers = #tpu.dot_dimension_numbers<[1], [0], [0], [1], [0, 0, 1, 1], [], []>} : vector<2x16xf32>, vector<16x128xf32>, vector<2x128xf32> -> vector<2x128xf32>
    %8 = vector.extract_strided_slice %7 {offsets = [0, 0], sizes = [2, 1], strides = [1, 1]} : vector<2x128xf32> to vector<2x1xf32>
    %9 = tpu.reciprocal %8 : vector<2x1xf32> -> vector<2x1xf32>
    %10 = vector.broadcast %9 : vector<2x1xf32> to vector<2x128xf32>
    %11 = arith.mulf %7, %10 : vector<2x128xf32>
    %c0_3 = arith.constant 0 : index
    %c512 = arith.constant 512 : index
    %12 = vector.load %arg5[%c0_3, %c512] : memref<2x896xf32, #tpu.memory_space<vmem>>, vector<2x128xf32>
    tpu.vector_store %arg5[%c0_3, %c512], %11 {strides = array<i32>} : memref<2x896xf32, #tpu.memory_space<vmem>>, vector<2x128xf32>,
    %c672 = arith.constant 672 : index
    %c0_4 = arith.constant 0 : index
    %13 = vector.load %arg4[%c672, %c0_4] : memref<688x128xf32, #tpu.memory_space<vmem>>, vector<16x128xf32>
    %cst_5 = arith.constant dense<0.000000e+00> : vector<2x128xf32>
    %14 = tpu.matmul %5, %13, %cst_5 {dimension_numbers = #tpu.dot_dimension_numbers<[1], [0], [0], [1], [0, 0, 1, 1], [], []>} : vector<2x16xf32>, vector<16x128xf32>, vector<2x128xf32> -> vector<2x128xf32>
    %15 = vector.broadcast %9 : vector<2x1xf32> to vector<2x128xf32>
    %16 = arith.mulf %14, %15 : vector<2x128xf32>
    %c0_6 = arith.constant 0 : index
    %c0_7 = arith.constant 0 : index
    %17 = vector.load %arg2[%c0_6, %c0_7] : memref<2x512xf32, #tpu.memory_space<vmem>>, vector<2x512xf32>
    %cst_8 = arith.constant 2.000000e+01 : f32
    %18 = vector.broadcast %cst_8 : f32 to vector<2x512xf32>
    %19 = arith.cmpf ogt, %17, %18 : vector<2x512xf32>
    %20 = math.exp %17 : vector<2x512xf32>
    %21 = math.log1p %20 : vector<2x512xf32>
    %22 = arith.select %19, %17, %21 : vector<2x512xi1>, vector<2x512xf32>
    %c0_9 = arith.constant 0 : index
    %c0_10 = arith.constant 0 : index
    %23 = vector.load %arg0[%c0_9, %c0_10] : memref<2x512xf32, #tpu.memory_space<vmem>>, vector<2x512xf32>
    %24 = arith.addf %22, %23 : vector<2x512xf32>
    %25 = vector.extract_strided_slice %24 {offsets = [0, 0], sizes = [2, 384], strides = [1, 1]} : vector<2x512xf32> to vector<2x384xf32>
    %c0_11 = arith.constant 0 : index
    %c0_12 = arith.constant 0 : index
    %26 = vector.load %arg5[%c0_11, %c0_12] : memref<2x896xf32, #tpu.memory_space<vmem>>, vector<2x384xf32>
    tpu.vector_store %arg5[%c0_11, %c0_12], %25 {strides = array<i32>} : memref<2x896xf32, #tpu.memory_space<vmem>>, vector<2x384xf32>,
    %27 = vector.extract_strided_slice %24 {offsets = [0, 384], sizes = [2, 128], strides = [1, 1]} : vector<2x512xf32> to vector<2x128xf32>
    %28 = arith.addf %27, %16 : vector<2x128xf32>
    %c0_13 = arith.constant 0 : index
    %c384 = arith.constant 384 : index
    %29 = vector.load %arg5[%c0_13, %c384] : memref<2x896xf32, #tpu.memory_space<vmem>>, vector<2x128xf32>
    tpu.vector_store %arg5[%c0_13, %c384], %28 {strides = array<i32>} : memref<2x896xf32, #tpu.memory_space<vmem>>, vector<2x128xf32>,
    %c0_14 = arith.constant 0 : index
    %c0_15 = arith.constant 0 : index
    %30 = vector.load %arg5[%c0_14, %c0_15] : memref<2x896xf32, #tpu.memory_space<vmem>>, vector<2x512xf32>
    %c0_16 = arith.constant 0 : index
    %c0_17 = arith.constant 0 : index
    %31 = vector.load %arg4[%c0_16, %c0_17] : memref<688x128xf32, #tpu.memory_space<vmem>>, vector<512x128xf32>
    %cst_18 = arith.constant dense<0.000000e+00> : vector<2x128xf32>
    %32 = tpu.matmul %30, %31, %cst_18 {dimension_numbers = #tpu.dot_dimension_numbers<[1], [0], [0], [1], [0, 0, 1, 1], [], []>} : vector<2x512xf32>, vector<512x128xf32>, vector<2x128xf32> -> vector<2x128xf32>
    %c512_19 = arith.constant 512 : index
    %c0_20 = arith.constant 0 : index
    %33 = vector.load %arg4[%c512_19, %c0_20] : memref<688x128xf32, #tpu.memory_space<vmem>>, vector<1x128xf32>
    %34 = vector.broadcast %33 : vector<1x128xf32> to vector<2x128xf32>
    %35 = arith.addf %32, %34 : vector<2x128xf32>
    %cst_21 = arith.constant 0.000000e+00 : f32
    %36 = vector.broadcast %cst_21 : f32 to vector<2x128xf32>
    %37 = arith.maximumf %35, %36 : vector<2x128xf32>
    %c0_22 = arith.constant 0 : index
    %c0_23 = arith.constant 0 : index
    %38 = vector.load %arg3[%c0_22, %c0_23] : memref<2x128xf32, #tpu.memory_space<vmem>>, vector<2x128xf32>
    %cst_24 = arith.constant 2.000000e+01 : f32
    %39 = vector.broadcast %cst_24 : f32 to vector<2x128xf32>
    %40 = arith.cmpf ogt, %38, %39 : vector<2x128xf32>
    %41 = math.exp %38 : vector<2x128xf32>
    %42 = math.log1p %41 : vector<2x128xf32>
    %43 = arith.select %40, %38, %42 : vector<2x128xi1>, vector<2x128xf32>
    %44 = arith.addf %43, %37 : vector<2x128xf32>
    %c0_25 = arith.constant 0 : index
    %c640 = arith.constant 640 : index
    %45 = vector.load %arg5[%c0_25, %c640] : memref<2x896xf32, #tpu.memory_space<vmem>>, vector<2x128xf32>
    tpu.vector_store %arg5[%c0_25, %c640], %44 {strides = array<i32>} : memref<2x896xf32, #tpu.memory_space<vmem>>, vector<2x128xf32>,
    %c520 = arith.constant 520 : index
    %c0_26 = arith.constant 0 : index
    %46 = vector.load %arg4[%c520, %c0_26] : memref<688x128xf32, #tpu.memory_space<vmem>>, vector<128x128xf32>
    %cst_27 = arith.constant dense<0.000000e+00> : vector<2x128xf32>
    %47 = tpu.matmul %44, %46, %cst_27 {dimension_numbers = #tpu.dot_dimension_numbers<[1], [0], [0], [1], [0, 0, 1, 1], [], []>} : vector<2x128xf32>, vector<128x128xf32>, vector<2x128xf32> -> vector<2x128xf32>
    %c648 = arith.constant 648 : index
    %c0_28 = arith.constant 0 : index
    %48 = vector.load %arg4[%c648, %c0_28] : memref<688x128xf32, #tpu.memory_space<vmem>>, vector<1x128xf32>
    %49 = vector.broadcast %48 : vector<1x128xf32> to vector<2x128xf32>
    %50 = arith.addf %47, %49 : vector<2x128xf32>
    %c0_29 = arith.constant 0 : index
    %c768 = arith.constant 768 : index
    %51 = vector.load %arg5[%c0_29, %c768] : memref<2x896xf32, #tpu.memory_space<vmem>>, vector<2x128xf32>
    tpu.vector_store %arg5[%c0_29, %c768], %50 {strides = array<i32>} : memref<2x896xf32, #tpu.memory_space<vmem>>, vector<2x128xf32>,
    return
  }
}

</mosaic_0001>

<llo_original>
// kernel: soundlenet5_forward.1
$region0: #{soundlenet5_forward.1}
  #allocation0 [shape = 'u32[]', space=smem, size = 0x4, offset = 0x4, fixed_abs, tag = 'smem constant byte address 0x4 - core index']
  #allocation1 [shape = 'u32[144,128]{1,0:T(1,128)}', space=vmem, size = 0x12000, scoped, tag = 'internal scratch']
  %s0 = inlined_call_operand.vmem [shape: f32[2,512], index: 0, kind: input, shape index: {}]
  %s1 = inlined_call_operand.vmem [shape: f32[2,16], index: 1, kind: input, shape index: {}]
  %s2 = inlined_call_operand.vmem [shape: f32[2,512], index: 2, kind: input, shape index: {}]
  %s3 = inlined_call_operand.vmem [shape: f32[2,128], index: 3, kind: input, shape index: {}]
  %s4 = inlined_call_operand.hbm [shape: f32[688,128], index: 4, kind: input, shape index: {}]
  %s5 = inlined_call_operand.vmem [shape: f32[2,896], index: 5, kind: output, shape index: {}]
  %s6 = sld [smem:[#allocation0]]
  $region34: #{soundlenet5_forward.1} parent=0
    _
  %s8 = ssub.s32 1, %s6
  %s9 = scalar_select 0, %s8, %s6
  $region1: #{soundlenet5_forward.1} parent=0
    #allocation2 [shape = 'u8[352256]{0}', space=vmem, size = 0x56000, scoped, tag = 'input window, operand 4, single buffered']
    #allocation3 [shape = 's32[1]{0}', space=sflag, size = 0x4, scoped, tag = 'scoped memory for soundlenet5_forward.1']
    %10 = vsyncpa [#allocation3], 0
    // Predicated region
    $region2: #{soundlenet5_forward.1} parent=1 // pred_check
      _
    $region3: #{soundlenet5_forward.1} parent=1 // pred_check_branch
      %12 = sbr.rel (0) target = $region5
    $region4: #{soundlenet5_forward.1} parent=1 // pred_region
      _
    $region5: #{soundlenet5_forward.1} parent=1 // pred_fallthru
      _
    // Predicated region
    $region6: #{soundlenet5_forward.1} parent=1 // pred_check
      _
    $region7: #{soundlenet5_forward.1} parent=1 // pred_check_branch
      %14 = sbr.rel (0) target = $region9
    $region8: #{soundlenet5_forward.1} parent=1 // pred_region
      _
    $region9: #{soundlenet5_forward.1} parent=1 // pred_fallthru
      _
    // Predicated region
    $region10: #{soundlenet5_forward.1} parent=1 // pred_check
      _
    $region11: #{soundlenet5_forward.1} parent=1 // pred_check_branch
      %16 = sbr.rel (0) target = $region13
    $region12: #{soundlenet5_forward.1} parent=1 // pred_region
      _
    $region13: #{soundlenet5_forward.1} parent=1 // pred_fallthru
      _
    // Predicated region
    $region14: #{soundlenet5_forward.1} parent=1 // pred_check
      _
    $region15: #{soundlenet5_forward.1} parent=1 // pred_check_branch
      %18 = sbr.rel (0) target = $region17
    $region16: #{soundlenet5_forward.1} parent=1 // pred_region
      _
    $region17: #{soundlenet5_forward.1} parent=1 // pred_fallthru
      _
    // Predicated region
    $region18: #{soundlenet5_forward.1} parent=1 // pred_check
      _
    $region19: #{soundlenet5_forward.1} parent=1 // pred_check_branch
      %20 = sbr.rel (0) target = $region21
    $region20: #{soundlenet5_forward.1} parent=1 // pred_region
      %s22 = ssub.s32 11008, 11008
      %23 = vsyncadd [#allocation3], %s22
      %s24 = sshll.u32 [#allocation2], 4
      %s25 = int_to_ptr.vmem [resolvable:$true] %s24
      %30 = dma.hbm_to_vmem [thread:$0]  %s4, 11008, %s25, [#allocation3], 128, 128, 8
    $region21: #{soundlenet5_forward.1} parent=1 // pred_fallthru
      _
    // Predicated region
    $region22: #{soundlenet5_forward.1} parent=1 // pred_check
      _
    $region23: #{soundlenet5_forward.1} parent=1 // pred_check_branch
      %32 = sbr.rel (0) target = $region25
    $region24: #{soundlenet5_forward.1} parent=1 // pred_region
      %33 = dma.done [#allocation3], 11008
    $region25: #{soundlenet5_forward.1} parent=1 // pred_fallthru
      _
    %v34 = vld [vmem:[%s1] sm:$0x3]
    %vm35 = vcmp.gt.f32.partialorder %v34, 20.0
    %v36 = vmul.f32 %v34, 1.442695
    %v37 = vpow.pop %v36
    %v38 = vadd.f32 %v37, 1.0
    %v39 = vlog2.pop %v38
    %v40 = vmul.f32 %v39, 0.6931472
    %v41 = vmul.f32 -0.5, %v37
    %v42 = vadd.f32 %v41, 1.0
    %v43 = vmul.f32 %v42, %v37
    %v44 = vand.u32 2147483647, %v37
    %vm45 = vcmp.lt.f32.partialorder %v44, 0.0004427343
    %v46 = vsel %vm45, %v43, %v40
    %v47 = vsel %vm35, %v34, %v46
    %v48 = vld [vmem:[#allocation2 + $0x290] sm:$0xff]
    %v49 = vld [vmem:[#allocation2 + $0x298] sm:$0xff]
    %vm50 = vcmask 130048
    %v52 = vsel %vm50, %v47, 0
    %54 = vmatprep.subr.mxu0 0.0
    %55 = vmatpush1.msra.mxu0 0.0
    %56 = vmatprep.subr.mxu0 0.0
    %57 = vmatpush1.msra.mxu0 0.0
    %58 = vmatprep.subr.mxu0 0.0
    %59 = vmatpush1.msra.mxu0 0.0
    %60 = vmatprep.subr.mxu0 0.0
    %61 = vmatpush1.msra.mxu0 0.0
    %62 = vmatprep.subr.mxu0 0.0
    %63 = vmatpush1.msra.mxu0 0.0
    %64 = vmatprep.subr.mxu0 0.0
    %65 = vmatpush1.msra.mxu0 0.0
    %66 = vmatprep.subr.mxu0 0.0
    %67 = vmatpush1.msra.mxu0 0.0
    %68 = vmatprep.subr.mxu0 0.0
    %69 = vmatpush1.msra.mxu0 0.0
    %70 = vmatprep.subr.mxu0 0.0
    %71 = vmatpush1.msra.mxu0 0.0
    %72 = vmatprep.subr.mxu0 0.0
    %73 = vmatpush1.msra.mxu0 0.0
    %74 = vmatprep.subr.mxu0 0.0
    %75 = vmatpush1.msra.mxu0 0.0
    %76 = vmatprep.subr.mxu0 0.0
    %77 = vmatpush1.msra.mxu0 0.0
    %78 = vmatprep.subr.mxu0 0.0
    %79 = vmatpush1.msra.mxu0 0.0
    %80 = vmatprep.subr.mxu0 0.0
    %81 = vmatpush1.msra.mxu0 0.0
    %82 = vmatprep.subr.mxu0 0.0
    %83 = vmatpush1.msra.mxu0 %v49
    %84 = vmatprep.subr.mxu0 0.0
    %85 = vmatpush1.msra.mxu0 %v48
    %86 = vmatprep.subr.mxu0 0.0
    %87 = vmatpush2.msra.mxu0 0.0
    %88 = vmatprep.subr.mxu0 0.0
    %89 = vmatpush2.msra.mxu0 0.0
    %90 = vmatprep.subr.mxu0 0.0
    %91 = vmatpush2.msra.mxu0 0.0
    %92 = vmatprep.subr.mxu0 0.0
    %93 = vmatpush2.msra.mxu0 0.0
    %94 = vmatprep.subr.mxu0 0.0
    %95 = vmatpush2.msra.mxu0 0.0
    %96 = vmatprep.subr.mxu0 0.0
    %97 = vmatpush2.msra.mxu0 0.0
    %98 = vmatprep.subr.mxu0 0.0
    %99 = vmatpush2.msra.mxu0 0.0
    %100 = vmatprep.subr.mxu0 0.0
    %101 = vmatpush2.msra.mxu0 0.0
    %102 = vmatprep.subr.mxu0 0.0
    %103 = vmatpush2.msra.mxu0 0.0
    %104 = vmatprep.subr.mxu0 0.0
    %105 = vmatpush2.msra.mxu0 0.0
    %106 = vmatprep.subr.mxu0 0.0
    %107 = vmatpush2.msra.mxu0 0.0
    %108 = vmatprep.subr.mxu0 0.0
    %109 = vmatpush2.msra.mxu0 0.0
    %110 = vmatprep.subr.mxu0 0.0
    %111 = vmatpush2.msra.mxu0 0.0
    %112 = vmatprep.subr.mxu0 0.0
    %113 = vmatpush2.msra.mxu0 0.0
    %114 = vmatprep.subr.mxu0 0.0
    %115 = vmatpush2.msra.mxu0 0.0
    %116 = vmatprep.subr.mxu0 0.0
    %117 = vmatpush2.msra.mxu0 0.0
    %118 = vmatprep.mubr.f32.mxu0 0.0
    %119 = vmatmul.mubr.f32.gmra.mxu0 %v52
    %v120 = vpop.f32.mrf.mxu0
    %v121 = vadd.f32 0.0, %v120
    %v122 = vpop.f32.mrf.mxu0
    %123 = vdwg.mxu0
    %v124 = vrcp.pop %v121
    %126 = vset.pattern.permute.xlu0 0
    %127 = vperm.xlu0 %126, %v124
    %v128 = vpop.permute.xlu0 %127
    %v130 = vmul.f32 %v121, %v128
    %131 = vst [vmem:[%s5 + $0x8] sm:$0x3] %v130
    %v132 = vld [vmem:[#allocation2 + $0x2a0] sm:$0xff]
    %v133 = vld [vmem:[#allocation2 + $0x2a8] sm:$0xff]
    %134 = vmatprep.subr.mxu0 0.0
    %135 = vmatpush1.msra.mxu0 0.0
    %136 = vmatprep.subr.mxu0 0.0
    %137 = vmatpush1.msra.mxu0 0.0
    %138 = vmatprep.subr.mxu0 0.0
    %139 = vmatpush1.msra.mxu0 0.0
    %140 = vmatprep.subr.mxu0 0.0
    %141 = vmatpush1.msra.mxu0 0.0
    %142 = vmatprep.subr.mxu0 0.0
    %143 = vmatpush1.msra.mxu0 0.0
    %144 = vmatprep.subr.mxu0 0.0
    %145 = vmatpush1.msra.mxu0 0.0
    %146 = vmatprep.subr.mxu0 0.0
    %147 = vmatpush1.msra.mxu0 0.0
    %148 = vmatprep.subr.mxu0 0.0
    %149 = vmatpush1.msra.mxu0 0.0
    %150 = vmatprep.subr.mxu0 0.0
    %151 = vmatpush1.msra.mxu0 0.0
    %152 = vmatprep.subr.mxu0 0.0
    %153 = vmatpush1.msra.mxu0 0.0
    %154 = vmatprep.subr.mxu0 0.0
    %155 = vmatpush1.msra.mxu0 0.0
    %156 = vmatprep.subr.mxu0 0.0
    %157 = vmatpush1.msra.mxu0 0.0
    %158 = vmatprep.subr.mxu0 0.0
    %159 = vmatpush1.msra.mxu0 0.0
    %160 = vmatprep.subr.mxu0 0.0
    %161 = vmatpush1.msra.mxu0 0.0
    %162 = vmatprep.subr.mxu0 0.0
    %163 = vmatpush1.msra.mxu0 %v133
    %164 = vmatprep.subr.mxu0 0.0
    %165 = vmatpush1.msra.mxu0 %v132
    %166 = vmatprep.subr.mxu0 0.0
    %167 = vmatpush2.msra.mxu0 0.0
    %168 = vmatprep.subr.mxu0 0.0
    %169 = vmatpush2.msra.mxu0 0.0
    %170 = vmatprep.subr.mxu0 0.0
    %171 = vmatpush2.msra.mxu0 0.0
    %172 = vmatprep.subr.mxu0 0.0
    %173 = vmatpush2.msra.mxu0 0.0
    %174 = vmatprep.subr.mxu0 0.0
    %175 = vmatpush2.msra.mxu0 0.0
    %176 = vmatprep.subr.mxu0 0.0
    %177 = vmatpush2.msra.mxu0 0.0
    %178 = vmatprep.subr.mxu0 0.0
    %179 = vmatpush2.msra.mxu0 0.0
    %180 = vmatprep.subr.mxu0 0.0
    %181 = vmatpush2.msra.mxu0 0.0
    %182 = vmatprep.subr.mxu0 0.0
    %183 = vmatpush2.msra.mxu0 0.0
    %184 = vmatprep.subr.mxu0 0.0
    %185 = vmatpush2.msra.mxu0 0.0
    %186 = vmatprep.subr.mxu0 0.0
    %187 = vmatpush2.msra.mxu0 0.0
    %188 = vmatprep.subr.mxu0 0.0
    %189 = vmatpush2.msra.mxu0 0.0
    %190 = vmatprep.subr.mxu0 0.0
    %191 = vmatpush2.msra.mxu0 0.0
    %192 = vmatprep.subr.mxu0 0.0
    %193 = vmatpush2.msra.mxu0 0.0
    %194 = vmatprep.subr.mxu0 0.0
    %195 = vmatpush2.msra.mxu0 0.0
    %196 = vmatprep.subr.mxu0 0.0
    %197 = vmatpush2.msra.mxu0 0.0
    %198 = vmatprep.mubr.f32.mxu0 0.0
    %199 = vmatmul.mubr.f32.gmra.mxu0 %v52
    %v200 = vpop.f32.mrf.mxu0
    %v201 = vadd.f32 0.0, %v200
    %v202 = vpop.f32.mrf.mxu0
    %203 = vdwg.mxu0
    %v204 = vmul.f32 %v201, %v128
    %v205 = vld [vmem:[%s2] sm:$0xff]
    %vm206 = vcmp.gt.f32.partialorder %v205, 20.0
    %v207 = vmul.f32 %v205, 1.442695
    %v208 = vpow.pop %v207
    %v209 = vadd.f32 %v208, 1.0
    %v210 = vlog2.pop %v209
    %v211 = vmul.f32 %v210, 0.6931472
    %v212 = vmul.f32 -0.5, %v208
    %v213 = vadd.f32 %v212, 1.0
    %v214 = vmul.f32 %v213, %v208
    %v215 = vand.u32 2147483647, %v208
    %vm216 = vcmp.lt.f32.partialorder %v215, 0.0004427343
    %v217 = vsel %vm216, %v214, %v211
    %v218 = vsel %vm206, %v205, %v217
    %v219 = vld [vmem:[%s0] sm:$0xff]
    %v220 = vadd.f32 %v218, %v219
    %221 = vst [vmem:[%s5] sm:$0x3f] %v220
    %v223 = vrot.slane %v220, 6
    %v225 = vadd.f32 %v223, %v204
    %226 = vst [vmem:[%s5 + $0x6] sm:$0x3] %v225
    %v227 = vld [vmem:[%s5] sm:$0xff]
    %v228 = vld [vmem:[#allocation2] sm:$0xff]
    %v229 = vld [vmem:[#allocation2 + $0x8] sm:$0xff]
    %v230 = vld [vmem:[#allocation2 + $0x10] sm:$0xff]
    %v231 = vld [vmem:[#allocation2 + $0x18] sm:$0xff]
    %v232 = vld [vmem:[#allocation2 + $0x20] sm:$0xff]
    %v233 = vld [vmem:[#allocation2 + $0x28] sm:$0xff]
    %v234 = vld [vmem:[#allocation2 + $0x30] sm:$0xff]
    %v235 = vld [vmem:[#allocation2 + $0x38] sm:$0xff]
    %v236 = vld [vmem:[#allocation2 + $0x40] sm:$0xff]
    %v237 = vld [vmem:[#allocation2 + $0x48] sm:$0xff]
    %v238 = vld [vmem:[#allocation2 + $0x50] sm:$0xff]
    %v239 = vld [vmem:[#allocation2 + $0x58] sm:$0xff]
    %v240 = vld [vmem:[#allocation2 + $0x60] sm:$0xff]
    %v241 = vld [vmem:[#allocation2 + $0x68] sm:$0xff]
    %v242 = vld [vmem:[#allocation2 + $0x70] sm:$0xff]
    %v243 = vld [vmem:[#allocation2 + $0x78] sm:$0xff]
    %v244 = vld [vmem:[#allocation2 + $0x80] sm:$0xff]
    %v245 = vld [vmem:[#allocation2 + $0x88] sm:$0xff]
    %v246 = vld [vmem:[#allocation2 + $0x90] sm:$0xff]
    %v247 = vld [vmem:[#allocation2 + $0x98] sm:$0xff]
    %v248 = vld [vmem:[#allocation2 + $0xa0] sm:$0xff]
    %v249 = vld [vmem:[#allocation2 + $0xa8] sm:$0xff]
    %v250 = vld [vmem:[#allocation2 + $0xb0] sm:$0xff]
    %v251 = vld [vmem:[#allocation2 + $0xb8] sm:$0xff]
    %v252 = vld [vmem:[#allocation2 + $0xc0] sm:$0xff]
    %v253 = vld [vmem:[#allocation2 + $0xc8] sm:$0xff]
    %v254 = vld [vmem:[#allocation2 + $0xd0] sm:$0xff]
    %v255 = vld [vmem:[#allocation2 + $0xd8] sm:$0xff]
    %v256 = vld [vmem:[#allocation2 + $0xe0] sm:$0xff]
    %v257 = vld [vmem:[#allocation2 + $0xe8] sm:$0xff]
    %v258 = vld [vmem:[#allocation2 + $0xf0] sm:$0xff]
    %v259 = vld [vmem:[#allocation2 + $0xf8] sm:$0xff]
    %v260 = vld [vmem:[#allocation2 + $0x100] sm:$0xff]
    %v261 = vld [vmem:[#allocation2 + $0x108] sm:$0xff]
    %v262 = vld [vmem:[#allocation2 + $0x110] sm:$0xff]
    %v263 = vld [vmem:[#allocation2 + $0x118] sm:$0xff]
    %v264 = vld [vmem:[#allocation2 + $0x120] sm:$0xff]
    %v265 = vld [vmem:[#allocation2 + $0x128] sm:$0xff]
    %v266 = vld [vmem:[#allocation2 + $0x130] sm:$0xff]
    %v267 = vld [vmem:[#allocation2 + $0x138] sm:$0xff]
    %v268 = vld [vmem:[#allocation2 + $0x140] sm:$0xff]
    %v269 = vld [vmem:[#allocation2 + $0x148] sm:$0xff]
    %v270 = vld [vmem:[#allocation2 + $0x150] sm:$0xff]
    %v271 = vld [vmem:[#allocation2 + $0x158] sm:$0xff]
    %v272 = vld [vmem:[#allocation2 + $0x160] sm:$0xff]
    %v273 = vld [vmem:[#allocation2 + $0x168] sm:$0xff]
    %v274 = vld [vmem:[#allocation2 + $0x170] sm:$0xff]
    %v275 = vld [vmem:[#allocation2 + $0x178] sm:$0xff]
    %v276 = vld [vmem:[#allocation2 + $0x180] sm:$0xff]
    %v277 = vld [vmem:[#allocation2 + $0x188] sm:$0xff]
    %v278 = vld [vmem:[#allocation2 + $0x190] sm:$0xff]
    %v279 = vld [vmem:[#allocation2 + $0x198] sm:$0xff]
    %v280 = vld [vmem:[#allocation2 + $0x1a0] sm:$0xff]
    %v281 = vld [vmem:[#allocation2 + $0x1a8] sm:$0xff]
    %v282 = vld [vmem:[#allocation2 + $0x1b0] sm:$0xff]
    %v283 = vld [vmem:[#allocation2 + $0x1b8] sm:$0xff]
    %v284 = vld [vmem:[#allocation2 + $0x1c0] sm:$0xff]
    %v285 = vld [vmem:[#allocation2 + $0x1c8] sm:$0xff]
    %v286 = vld [vmem:[#allocation2 + $0x1d0] sm:$0xff]
    %v287 = vld [vmem:[#allocation2 + $0x1d8] sm:$0xff]
    %v288 = vld [vmem:[#allocation2 + $0x1e0] sm:$0xff]
    %v289 = vld [vmem:[#allocation2 + $0x1e8] sm:$0xff]
    %v290 = vld [vmem:[#allocation2 + $0x1f0] sm:$0xff]
    %v291 = vld [vmem:[#allocation2 + $0x1f8] sm:$0xff]
    %v292 = vld [vmem:[#allocation2 + $0x200] sm:$0x1]
    %v293 = vlaneseq
    %v294 = vshrl.u32 %v293, 7
    %v295 = vsub.s32 0, %v294
    %v296 = vrot.slane %v292, %v295
    %v298 = vcombine.high %v227, %v227
    %v300 = vunpack.c.l.s4 1983009808
    %v301 = vunpack.c.0.s8 %v300
    %v302 = vlaneseq
    %v303 = vshrl.u32 %v302, 7
    %v304 = vsub.s32 %v301, %v303
    %v305 = vrot.slane %v227, %v304
    %v307 = vunpack.c.l.s4 1983009808
    %v308 = vunpack.c.0.s8 %v307
    %v309 = vlaneseq
    %v310 = vshrl.u32 %v309, 7
    %v311 = vsub.s32 %v308, %v310
    %v312 = vrot.slane %v298, %v311
    %v313 = vcombine.high %v305, %v305
    %v314 = vcombine.high %v312, %v312
    %319 = vmatprep.subr.mxu0 0.0
    %320 = vmatpush1.msra.mxu0 %v243
    %321 = vmatprep.subr.mxu0 0.0
    %322 = vmatpush1.msra.mxu0 %v242
    %323 = vmatprep.subr.mxu0 0.0
    %324 = vmatpush1.msra.mxu0 %v241
    %325 = vmatprep.subr.mxu0 0.0
    %326 = vmatpush1.msra.mxu0 %v240
    %327 = vmatprep.subr.mxu0 0.0
    %328 = vmatpush1.msra.mxu0 %v239
    %329 = vmatprep.subr.mxu0 0.0
    %330 = vmatpush1.msra.mxu0 %v238
    %331 = vmatprep.subr.mxu0 0.0
    %332 = vmatpush1.msra.mxu0 %v237
    %333 = vmatprep.subr.mxu0 0.0
    %334 = vmatpush1.msra.mxu0 %v236
    %335 = vmatprep.subr.mxu0 0.0
    %336 = vmatpush1.msra.mxu0 %v235
    %337 = vmatprep.subr.mxu0 0.0
    %338 = vmatpush1.msra.mxu0 %v234
    %339 = vmatprep.subr.mxu0 0.0
    %340 = vmatpush1.msra.mxu0 %v233
    %341 = vmatprep.subr.mxu0 0.0
    %342 = vmatpush1.msra.mxu0 %v232
    %343 = vmatprep.subr.mxu0 0.0
    %344 = vmatpush1.msra.mxu0 %v231
    %345 = vmatprep.subr.mxu0 0.0
    %346 = vmatpush1.msra.mxu0 %v230
    %347 = vmatprep.subr.mxu0 0.0
    %348 = vmatpush1.msra.mxu0 %v229
    %349 = vmatprep.subr.mxu0 0.0
    %350 = vmatpush1.msra.mxu0 %v228
    %351 = vmatprep.subr.mxu0 0.0
    %352 = vmatpush2.msra.mxu0 %v259
    %353 = vmatprep.subr.mxu0 0.0
    %354 = vmatpush2.msra.mxu0 %v258
    %355 = vmatprep.subr.mxu0 0.0
    %356 = vmatpush2.msra.mxu0 %v257
    %357 = vmatprep.subr.mxu0 0.0
    %358 = vmatpush2.msra.mxu0 %v256
    %359 = vmatprep.subr.mxu0 0.0
    %360 = vmatpush2.msra.mxu0 %v255
    %361 = vmatprep.subr.mxu0 0.0
    %362 = vmatpush2.msra.mxu0 %v254
    %363 = vmatprep.subr.mxu0 0.0
    %364 = vmatpush2.msra.mxu0 %v253
    %365 = vmatprep.subr.mxu0 0.0
    %366 = vmatpush2.msra.mxu0 %v252
    %367 = vmatprep.subr.mxu0 0.0
    %368 = vmatpush2.msra.mxu0 %v251
    %369 = vmatprep.subr.mxu0 0.0
    %370 = vmatpush2.msra.mxu0 %v250
    %371 = vmatprep.subr.mxu0 0.0
    %372 = vmatpush2.msra.mxu0 %v249
    %373 = vmatprep.subr.mxu0 0.0
    %374 = vmatpush2.msra.mxu0 %v248
    %375 = vmatprep.subr.mxu0 0.0
    %376 = vmatpush2.msra.mxu0 %v247
    %377 = vmatprep.subr.mxu0 0.0
    %378 = vmatpush2.msra.mxu0 %v246
    %379 = vmatprep.subr.mxu0 0.0
    %380 = vmatpush2.msra.mxu0 %v245
    %381 = vmatprep.subr.mxu0 0.0
    %382 = vmatpush2.msra.mxu0 %v244
    %383 = vmatprep.mubr.f32.mxu0 %v313
    %384 = vmatmul.mubr.f32.gmra.mxu0 %v305
    %v385 = vpop.f32.mrf.mxu0
    %v386 = vadd.f32 %v296, %v385
    %v387 = vpop.f32.mrf.mxu0
    %388 = vdwg.mxu0
    %389 = vmatprep.subr.mxu0 0.0
    %390 = vmatpush1.msra.mxu0 %v275
    %391 = vmatprep.subr.mxu0 0.0
    %392 = vmatpush1.msra.mxu0 %v274
    %393 = vmatprep.subr.mxu0 0.0
    %394 = vmatpush1.msra.mxu0 %v273
    %395 = vmatprep.subr.mxu0 0.0
    %396 = vmatpush1.msra.mxu0 %v272
    %397 = vmatprep.subr.mxu0 0.0
    %398 = vmatpush1.msra.mxu0 %v271
    %399 = vmatprep.subr.mxu0 0.0
    %400 = vmatpush1.msra.mxu0 %v270
    %401 = vmatprep.subr.mxu0 0.0
    %402 = vmatpush1.msra.mxu0 %v269
    %403 = vmatprep.subr.mxu0 0.0
    %404 = vmatpush1.msra.mxu0 %v268
    %405 = vmatprep.subr.mxu0 0.0
    %406 = vmatpush1.msra.mxu0 %v267
    %407 = vmatprep.subr.mxu0 0.0
    %408 = vmatpush1.msra.mxu0 %v266
    %409 = vmatprep.subr.mxu0 0.0
    %410 = vmatpush1.msra.mxu0 %v265
    %411 = vmatprep.subr.mxu0 0.0
    %412 = vmatpush1.msra.mxu0 %v264
    %413 = vmatprep.subr.mxu0 0.0
    %414 = vmatpush1.msra.mxu0 %v263
    %415 = vmatprep.subr.mxu0 0.0
    %416 = vmatpush1.msra.mxu0 %v262
    %417 = vmatprep.subr.mxu0 0.0
    %418 = vmatpush1.msra.mxu0 %v261
    %419 = vmatprep.subr.mxu0 0.0
    %420 = vmatpush1.msra.mxu0 %v260
    %421 = vmatprep.subr.mxu0 0.0
    %422 = vmatpush2.msra.mxu0 %v291
    %423 = vmatprep.subr.mxu0 0.0
    %424 = vmatpush2.msra.mxu0 %v290
    %425 = vmatprep.subr.mxu0 0.0
    %426 = vmatpush2.msra.mxu0 %v289
    %427 = vmatprep.subr.mxu0 0.0
    %428 = vmatpush2.msra.mxu0 %v288
    %429 = vmatprep.subr.mxu0 0.0
    %430 = vmatpush2.msra.mxu0 %v287
    %431 = vmatprep.subr.mxu0 0.0
    %432 = vmatpush2.msra.mxu0 %v286
    %433 = vmatprep.subr.mxu0 0.0
    %434 = vmatpush2.msra.mxu0 %v285
    %435 = vmatprep.subr.mxu0 0.0
    %436 = vmatpush2.msra.mxu0 %v284
    %437 = vmatprep.subr.mxu0 0.0
    %438 = vmatpush2.msra.mxu0 %v283
    %439 = vmatprep.subr.mxu0 0.0
    %440 = vmatpush2.msra.mxu0 %v282
    %441 = vmatprep.subr.mxu0 0.0
    %442 = vmatpush2.msra.mxu0 %v281
    %443 = vmatprep.subr.mxu0 0.0
    %444 = vmatpush2.msra.mxu0 %v280
    %445 = vmatprep.subr.mxu0 0.0
    %446 = vmatpush2.msra.mxu0 %v279
    %447 = vmatprep.subr.mxu0 0.0
    %448 = vmatpush2.msra.mxu0 %v278
    %449 = vmatprep.subr.mxu0 0.0
    %450 = vmatpush2.msra.mxu0 %v277
    %451 = vmatprep.subr.mxu0 0.0
    %452 = vmatpush2.msra.mxu0 %v276
    %453 = vmatprep.mubr.f32.mxu0 %v314
    %454 = vmatmul.mubr.f32.gmra.mxu0 %v312
    %v455 = vpop.f32.mrf.mxu0
    %v456 = vadd.f32 %v386, %v455
    %v457 = vpop.f32.mrf.mxu0
    %458 = vdwg.mxu0
    %v459 = vmax.f32 %v456, 0.0
    %v460 = vld [vmem:[%s3] sm:$0x3]
    %vm461 = vcmp.gt.f32.partialorder %v460, 20.0
    %v462 = vmul.f32 %v460, 1.442695
    %v463 = vpow.pop %v462
    %v464 = vadd.f32 %v463, 1.0
    %v465 = vlog2.pop %v464
    %v466 = vmul.f32 %v465, 0.6931472
    %v467 = vmul.f32 -0.5, %v463
    %v468 = vadd.f32 %v467, 1.0
    %v469 = vmul.f32 %v468, %v463
    %v470 = vand.u32 2147483647, %v463
    %vm471 = vcmp.lt.f32.partialorder %v470, 0.0004427343
    %v472 = vsel %vm471, %v469, %v466
    %v473 = vsel %vm461, %v460, %v472
    %v474 = vadd.f32 %v473, %v459
    %475 = vst [vmem:[%s5 + $0xa] sm:$0x3] %v474
    %v476 = vld [vmem:[#allocation2 + $0x208] sm:$0xff]
    %v477 = vld [vmem:[#allocation2 + $0x210] sm:$0xff]
    %v478 = vld [vmem:[#allocation2 + $0x218] sm:$0xff]
    %v479 = vld [vmem:[#allocation2 + $0x220] sm:$0xff]
    %v480 = vld [vmem:[#allocation2 + $0x228] sm:$0xff]
    %v481 = vld [vmem:[#allocation2 + $0x230] sm:$0xff]
    %v482 = vld [vmem:[#allocation2 + $0x238] sm:$0xff]
    %v483 = vld [vmem:[#allocation2 + $0x240] sm:$0xff]
    %v484 = vld [vmem:[#allocation2 + $0x248] sm:$0xff]
    %v485 = vld [vmem:[#allocation2 + $0x250] sm:$0xff]
    %v486 = vld [vmem:[#allocation2 + $0x258] sm:$0xff]
    %v487 = vld [vmem:[#allocation2 + $0x260] sm:$0xff]
    %v488 = vld [vmem:[#allocation2 + $0x268] sm:$0xff]
    %v489 = vld [vmem:[#allocation2 + $0x270] sm:$0xff]
    %v490 = vld [vmem:[#allocation2 + $0x278] sm:$0xff]
    %v491 = vld [vmem:[#allocation2 + $0x280] sm:$0xff]
    %v492 = vld [vmem:[#allocation2 + $0x288] sm:$0x1]
    %v493 = vlaneseq
    %v494 = vshrl.u32 %v493, 7
    %v495 = vsub.s32 0, %v494
    %v496 = vrot.slane %v492, %v495
    %497 = vmatprep.subr.mxu0 0.0
    %498 = vmatpush1.msra.mxu0 %v491
    %499 = vmatprep.subr.mxu0 0.0
    %500 = vmatpush1.msra.mxu0 %v490
    %501 = vmatprep.subr.mxu0 0.0
    %502 = vmatpush1.msra.mxu0 %v489
    %503 = vmatprep.subr.mxu0 0.0
    %504 = vmatpush1.msra.mxu0 %v488
    %505 = vmatprep.subr.mxu0 0.0
    %506 = vmatpush1.msra.mxu0 %v487
    %507 = vmatprep.subr.mxu0 0.0
    %508 = vmatpush1.msra.mxu0 %v486
    %509 = vmatprep.subr.mxu0 0.0
    %510 = vmatpush1.msra.mxu0 %v485
    %511 = vmatprep.subr.mxu0 0.0
    %512 = vmatpush1.msra.mxu0 %v484
    %513 = vmatprep.subr.mxu0 0.0
    %514 = vmatpush1.msra.mxu0 %v483
    %515 = vmatprep.subr.mxu0 0.0
    %516 = vmatpush1.msra.mxu0 %v482
    %517 = vmatprep.subr.mxu0 0.0
    %518 = vmatpush1.msra.mxu0 %v481
    %519 = vmatprep.subr.mxu0 0.0
    %520 = vmatpush1.msra.mxu0 %v480
    %521 = vmatprep.subr.mxu0 0.0
    %522 = vmatpush1.msra.mxu0 %v479
    %523 = vmatprep.subr.mxu0 0.0
    %524 = vmatpush1.msra.mxu0 %v478
    %525 = vmatprep.subr.mxu0 0.0
    %526 = vmatpush1.msra.mxu0 %v477
    %527 = vmatprep.subr.mxu0 0.0
    %528 = vmatpush1.msra.mxu0 %v476
    %529 = vmatprep.subr.mxu0 0.0
    %530 = vmatpush2.msra.mxu0 0.0
    %531 = vmatprep.subr.mxu0 0.0
    %532 = vmatpush2.msra.mxu0 0.0
    %533 = vmatprep.subr.mxu0 0.0
    %534 = vmatpush2.msra.mxu0 0.0
    %535 = vmatprep.subr.mxu0 0.0
    %536 = vmatpush2.msra.mxu0 0.0
    %537 = vmatprep.subr.mxu0 0.0
    %538 = vmatpush2.msra.mxu0 0.0
    %539 = vmatprep.subr.mxu0 0.0
    %540 = vmatpush2.msra.mxu0 0.0
    %541 = vmatprep.subr.mxu0 0.0
    %542 = vmatpush2.msra.mxu0 0.0
    %543 = vmatprep.subr.mxu0 0.0
    %544 = vmatpush2.msra.mxu0 0.0
    %545 = vmatprep.subr.mxu0 0.0
    %546 = vmatpush2.msra.mxu0 0.0
    %547 = vmatprep.subr.mxu0 0.0
    %548 = vmatpush2.msra.mxu0 0.0
    %549 = vmatprep.subr.mxu0 0.0
    %550 = vmatpush2.msra.mxu0 0.0
    %551 = vmatprep.subr.mxu0 0.0
    %552 = vmatpush2.msra.mxu0 0.0
    %553 = vmatprep.subr.mxu0 0.0
    %554 = vmatpush2.msra.mxu0 0.0
    %555 = vmatprep.subr.mxu0 0.0
    %556 = vmatpush2.msra.mxu0 0.0
    %557 = vmatprep.subr.mxu0 0.0
    %558 = vmatpush2.msra.mxu0 0.0
    %559 = vmatprep.subr.mxu0 0.0
    %560 = vmatpush2.msra.mxu0 0.0
    %561 = vmatprep.mubr.f32.mxu0 0.0
    %562 = vmatmul.mubr.f32.gmra.mxu0 %v474
    %v563 = vpop.f32.mrf.mxu0
    %v564 = vadd.f32 %v496, %v563
    %v565 = vpop.f32.mrf.mxu0
    %566 = vdwg.mxu0
    %567 = vst [vmem:[%s5 + $0xc] sm:$0x3] %v564
    // Predicated region
    $region26: #{soundlenet5_forward.1} parent=1 // pred_check
      _
    $region27: #{soundlenet5_forward.1} parent=1 // pred_check_branch
      %569 = sbr.rel (0) target = $region29
    $region28: #{soundlenet5_forward.1} parent=1 // pred_region
      _
    $region29: #{soundlenet5_forward.1} parent=1 // pred_fallthru
      _
    // Predicated region
    $region30: #{soundlenet5_forward.1} parent=1 // pred_check
      _
    $region31: #{soundlenet5_forward.1} parent=1 // pred_check_branch
      %571 = sbr.rel (0) target = $region33
    $region32: #{soundlenet5_forward.1} parent=1 // pred_region
      _
    $region33: #{soundlenet5_forward.1} parent=1 // pred_fallthru
      _
    %572 = vsyncpa [#allocation3], 1

</llo_original>
